<compile_context>
chip_gen: v7x
topology: tpu7x:2x2x1
jax: 0.10.0
libtpu: 0.0.40
codegen_flags: <defaults>
</compile_context>

<pallas_src>
import functools

import jax
import jax.numpy as jnp
from jax.experimental import pallas as pl
from jax.experimental.pallas import tpu as pltpu


# ---------------------------------------------------------------------------
# Kernel 1: shared pre-compute (embeddings for stacked [x ; ref_x], fused V).
# ---------------------------------------------------------------------------
def _embed_and_v_kernel(feats_ref, refx_ref, w0_ref, b0_ref, w1_ref, b1_ref,
                        wout_ref, emb_ref, v_ref, *, groups, scale_qrt,
                        compute_dtype):
    def embed(v, w_ref, b_ref):
        # ConvModule(activation='relu', activate_last=False): relu -> 1x1 conv (+bias)
        v = jnp.maximum(v, 0.0).astype(compute_dtype)        # bf16 MXU operands
        w = w_ref[...].astype(compute_dtype)
        return jax.lax.dot_general(v, w, (((1,), (0,)), ((), ())),
                                   preferred_element_type=jnp.float32) + b_ref[...]

    e = embed(embed(feats_ref[...], w0_ref, b0_ref), w1_ref, b1_ref)
    # fold the attention 1/sqrt(d) scale once: (q*s)·(k*s) == q·k / sqrt(d)
    emb_ref[...] = (e * scale_qrt).astype(emb_ref.dtype)

    # V[:, g*cog:(g+1)*cog] = ref_x @ conv_out_w[g]  (grouped 1x1 conv fused once)
    refx = refx_ref[...].astype(compute_dtype)
    C = refx.shape[1]
    cog = v_ref.shape[1] // groups
    for g in range(groups):                                   # static unroll
        wg = wout_ref[g * C:(g + 1) * C, :].astype(compute_dtype)
        vg = jax.lax.dot_general(refx, wg, (((1,), (0,)), ((), ())),
                                 preferred_element_type=jnp.float32)
        v_ref[:, g * cog:(g + 1) * cog] = vg.astype(v_ref.dtype)


# ---------------------------------------------------------------------------
# Kernel 2: per-query-tile relation attention (grid over N0, parallel).
# ---------------------------------------------------------------------------
def _relations_attn_kernel(ex_ref, er_ref, v_ref, rois_ref, rrt_ref, bout_ref,
                           out_ref, *, groups, compute_dtype):
    ex = ex_ref[...]                      # (TN, inter), scale already folded in
    er = er_ref[...]                      # (N1, inter), resident across tiles
    inter = ex.shape[1]
    d = inter // groups
    C = out_ref.shape[1]
    cog = C // groups

    # --- pairwise IoU (mmdet-v1 "+1" convention) as multiplicative softmax weight ---
    rois = rois_ref[...]                  # (TN, 5): [batch_idx, x1, y1, x2, y2]
    rrt = rrt_ref[...]                    # (8, N1): ref rois^T padded to 8 sublanes
    x1 = rois[:, 1:2]; y1 = rois[:, 2:3]; x2 = rois[:, 3:4]; y2 = rois[:, 4:5]
    rx1 = rrt[1:2, :]; ry1 = rrt[2:3, :]; rx2 = rrt[3:4, :]; ry2 = rrt[4:5, :]
    iw = jnp.maximum(jnp.minimum(x2, rx2) - jnp.maximum(x1, rx1) + 1.0, 0.0)
    ih = jnp.maximum(jnp.minimum(y2, ry2) - jnp.maximum(y1, ry1) + 1.0, 0.0)
    inter_area = iw * ih
    area1 = (x2 - x1 + 1.0) * (y2 - y1 + 1.0)          # (TN, 1)
    area2 = (rx2 - rx1 + 1.0) * (ry2 - ry1 + 1.0)      # (1, N1)
    union = area1 + area2 - inter_area                 # > 0 with the +1 convention
    iou_w = inter_area * pl.reciprocal(union, approx=True) + 1e-6   # (TN, N1)

    v = v_ref[...].astype(compute_dtype)               # (N1, C) fused conv_out ref
    bout = bout_ref[...]                               # (1, C)

    for g in range(groups):                            # static unroll: no 3-D transposes
        xg = ex[:, g * d:(g + 1) * d]                  # (TN, d)
        rg = er[:, g * d:(g + 1) * d]                  # (N1, d)
        s = jax.lax.dot_general(xg, rg, (((1,), (1,)), ((), ())),
                                preferred_element_type=jnp.float32)   # (TN, N1)
        # softmax(s + log(iou+1e-6)) == iou_w*exp(s) / sum(iou_w*exp(s)); rowmax(s)
        # is a valid stabilizer, and the log/exp roundtrip on iou is eliminated.
        p = iou_w * jnp.exp(s - jnp.max(s, axis=-1, keepdims=True))
        denom = jnp.sum(p, axis=-1, keepdims=True)     # (TN, 1), f32
        og = jax.lax.dot_general(p.astype(compute_dtype),
                                 v[:, g * cog:(g + 1) * cog],
                                 (((1,), (0,)), ((), ())),
                                 preferred_element_type=jnp.float32)  # (TN, cog)
        og = og * pl.reciprocal(denom, approx=True) + bout[:, g * cog:(g + 1) * cog]
        out_ref[:, g * cog:(g + 1) * cog] = og.astype(out_ref.dtype)


# ---------------------------------------------------------------------------
# Wrapper
# ---------------------------------------------------------------------------
def _round_up(a, b):
    return (a + b - 1) // b * b


def relations_forward(in_x, rois, params, in_ref_x=None, ref_rois=None, *,
                      groups, compute_dtype=jnp.bfloat16, max_tile_n0=256):
    self_ref = in_ref_x is None
    if self_ref:
        in_ref_x = in_x
        ref_rois = rois
    w0, b0, w1, b1, wout, bout = params
    N0, C = in_x.shape
    N1 = in_ref_x.shape[0]
    inter = w0.shape[1]
    d = inter // groups

    # Tile query rows only; keys (N1) stay whole per block -> no softmax masking.
    tile_n0 = min(max_tile_n0, _round_up(N0, 8))
    n0p = _round_up(N0, tile_n0)
    if n0p != N0:
        # zero-padded query rows/rois give finite (discarded) outputs: iou->0,
        # denom >= 1e-6, no NaN/Inf possible.
        x_pad = jnp.zeros((n0p, C), in_x.dtype).at[:N0].set(in_x)
        rois_pad = jnp.zeros((n0p, rois.shape[1]), jnp.float32).at[:N0].set(rois)
    else:
        x_pad, rois_pad = in_x, rois.astype(jnp.float32)

    # Stacked embed input: one matmul chain for x and ref_x; ref half skipped
    # entirely when ref == self.
    feats = x_pad if self_ref else jnp.concatenate([x_pad, in_ref_x], axis=0)
    scale_qrt = 1.0 / float(d) ** 0.25

    vmem = pl.BlockSpec(memory_space=pltpu.MemorySpace.VMEM)
    nt = feats.shape[0]
    k1_cost = pl.CostEstimate(
        flops=2 * nt * C * inter + 2 * nt * inter * inter + 2 * N1 * C * C,
        transcendentals=0,
        bytes_accessed=4 * (feats.size + in_ref_x.size + w0.size + w1.size
                            + wout.size + b0.size + b1.size + nt * inter + N1 * C))
    emb, v = pl.pallas_call(
        functools.partial(_embed_and_v_kernel, groups=groups,
                          scale_qrt=scale_qrt, compute_dtype=compute_dtype),
        out_shape=(jax.ShapeDtypeStruct((nt, inter), jnp.float32),
                   jax.ShapeDtypeStruct((N1, C), jnp.float32)),
        in_specs=[vmem] * 7,
        out_specs=(vmem, vmem),
        compiler_params=pltpu.CompilerParams(vmem_limit_bytes=48 * 1024 * 1024),
        cost_estimate=k1_cost,
    )(feats, in_ref_x, w0, b0.reshape(1, -1), w1, b1.reshape(1, -1), wout)

    ex_all = emb if self_ref else emb[:n0p]            # (n0p, inter)
    er = emb[:N1] if self_ref else emb[n0p:]           # (N1, inter)

    # ref rois, transposed and padded to 8 sublanes (avoids 5-row masked loads)
    rrt = jnp.zeros((8, N1), jnp.float32).at[:5, :].set(ref_rois.T.astype(jnp.float32))

    grid = (n0p // tile_n0,)
    k2_cost = pl.CostEstimate(
        flops=2 * groups * n0p * N1 * d + 2 * n0p * N1 * C + 12 * n0p * N1,
        transcendentals=(groups + 1) * n0p * N1 + groups * n0p,
        bytes_accessed=4 * (n0p * inter + N1 * inter + N1 * C + n0p * 5
                            + 8 * N1 + C + n0p * C))
    out = pl.pallas_call(
        functools.partial(_relations_attn_kernel, groups=groups,
                          compute_dtype=compute_dtype),
        out_shape=jax.ShapeDtypeStruct((n0p, C), jnp.float32),
        grid_spec=pltpu.PrefetchScalarGridSpec(
            num_scalar_prefetch=0,
            grid=grid,
            in_specs=[
                pl.BlockSpec((tile_n0, inter), lambda i: (i, 0)),           # ex tile
                pl.BlockSpec((N1, inter), lambda i: (0, 0)),                # er (resident)
                pl.BlockSpec((N1, C), lambda i: (0, 0)),                    # V  (resident)
                pl.BlockSpec((tile_n0, rois_pad.shape[1]), lambda i: (i, 0)),  # rois tile
                pl.BlockSpec((8, N1), lambda i: (0, 0)),                    # ref rois^T
                pl.BlockSpec((1, C), lambda i: (0, 0)),                     # conv_out bias
            ],
            out_specs=pl.BlockSpec((tile_n0, C), lambda i: (i, 0)),
        ),
        compiler_params=pltpu.CompilerParams(
            dimension_semantics=("parallel",),     # v7x: split query tiles across TCs
            vmem_limit_bytes=48 * 1024 * 1024),
        cost_estimate=k2_cost,
    )(ex_all, er, v, rois_pad, rrt, bout.reshape(1, -1))
    return out[:N0]


# ---------------------------- pure-JAX reference ----------------------------
def _bbox_overlaps_ref(b1, b2):
    lt = jnp.maximum(b1[:, None, :2], b2[None, :, :2])
    rb = jnp.minimum(b1[:, None, 2:], b2[None, :, 2:])
    wh = jnp.maximum(rb - lt + 1.0, 0.0)
    overlap = wh[..., 0] * wh[..., 1]
    a1 = (b1[:, 2] - b1[:, 0] + 1.0) * (b1[:, 3] - b1[:, 1] + 1.0)
    a2 = (b2[:, 2] - b2[:, 0] + 1.0) * (b2[:, 3] - b2[:, 1] + 1.0)
    return overlap / (a1[:, None] + a2[None, :] - overlap)


def relations_reference(in_x, rois, params, *, groups, in_ref_x=None, ref_rois=None):
    if in_ref_x is None:
        in_ref_x = in_x
        ref_rois = rois
    w0, b0, w1, b1, wout, bout = params
    N0, C = in_x.shape
    N1 = in_ref_x.shape[0]
    ex = jnp.maximum(in_x, 0.0) @ w0 + b0
    er = jnp.maximum(in_ref_x, 0.0) @ w0 + b0
    ex = jnp.maximum(ex, 0.0) @ w1 + b1
    er = jnp.maximum(er, 0.0) @ w1 + b1
    d = ex.shape[1] // groups
    xg = ex.reshape(N0, groups, d).transpose(1, 0, 2)
    rg = er.reshape(N1, groups, d).transpose(1, 2, 0)
    mat = jnp.matmul(xg, rg) / (d ** 0.5)              # (G, N0, N1)
    mat = mat.transpose(1, 0, 2)                       # (N0, G, N1)
    ious = _bbox_overlaps_ref(rois[:, 1:], ref_rois[:, 1:])
    mat = mat + jnp.log(ious + 1e-6)[:, None, :]
    mat = jax.nn.softmax(mat, axis=2)
    y = mat.reshape(-1, N1) @ in_ref_x                 # (N0*G, C)
    y = y.reshape(N0, groups, C)
    outs = [y[:, g] @ wout[g * C:(g + 1) * C] for g in range(groups)]
    return jnp.concatenate(outs, axis=-1) + bout


if __name__ == "__main__":
    C = 64          # in_channels
    INTER = 64      # inter_channels (== in_channels so conv_out type-checks)
    G = 4           # groups

    key = jax.random.PRNGKey(0)
    ks = jax.random.split(key, 10)

    def make_rois(k, n):
        k1, k2, k3, k4 = jax.random.split(k, 4)
        x1 = jax.random.uniform(k1, (n, 1), minval=0.0, maxval=50.0)
        y1 = jax.random.uniform(k2, (n, 1), minval=0.0, maxval=50.0)
        w = jax.random.uniform(k3, (n, 1), minval=5.0, maxval=40.0)
        h = jax.random.uniform(k4, (n, 1), minval=5.0, maxval=40.0)
        bidx = jnp.zeros((n, 1), jnp.float32)
        return jnp.concatenate([bidx, x1, y1, x1 + w, y1 + h], axis=1)

    # deterministic synthetic parameters (matmul layout: (Cin, Cout))
    w0 = jax.random.normal(ks[2], (C, INTER), jnp.float32) / jnp.sqrt(C)
    b0 = jax.random.normal(ks[3], (INTER,), jnp.float32) * 0.1
    w1 = jax.random.normal(ks[4], (INTER, INTER), jnp.float32) / jnp.sqrt(INTER)
    b1 = jax.random.normal(ks[5], (INTER,), jnp.float32) * 0.1
    cog = C // G
    wout = jax.random.normal(ks[6], (G * C, cog), jnp.float32) / jnp.sqrt(C)
    bout = jax.random.normal(ks[7], (C,), jnp.float32) * 0.1
    params = (w0, b0, w1, b1, wout, bout)

    # tolerance is slightly looser than pure-f32 because of bf16 MXU operands and
    # approx reciprocals (f32 accumulation + max-subtraction keep it well inside).
    RTOL = ATOL = 2e-2

    # --- test 1: self-reference (in_ref_x is None) ---
    N0 = 16
    in_x = jax.random.normal(ks[0], (N0, C), jnp.float32)
    rois = make_rois(ks[1], N0)
    out = jax.block_until_ready(relations_forward(in_x, rois, params, groups=G))
    ref = relations_reference(in_x, rois, params, groups=G)
    assert out.shape == (N0, C)
    assert bool(jnp.allclose(out, ref, rtol=RTOL, atol=ATOL)), "self-ref mismatch"

    # --- test 2: separate reference set (stacked-embed path) ---
    N1 = 24
    ref_x = jax.random.normal(ks[8], (N1, C), jnp.float32)
    ref_rois = make_rois(ks[9], N1)
    out2 = jax.block_until_ready(
        relations_forward(in_x, rois, params, ref_x, ref_rois, groups=G))
    ref2 = relations_reference(in_x, rois, params, groups=G,
                               in_ref_x=ref_x, ref_rois=ref_rois)
    assert out2.shape == (N0, C)
    assert bool(jnp.allclose(out2, ref2, rtol=RTOL, atol=ATOL)), "cross-ref mismatch"

    print("KERNEL_OK")
</pallas_src>

<mosaic_0001>
module attributes {stable_mosaic.version = 11 : i64} {
  func.func @_embed_and_v_kernel(%arg0: memref<16x64xf32, #tpu.memory_space<vmem>>, %arg1: memref<16x64xf32, #tpu.memory_space<vmem>>, %arg2: memref<64x64xf32, #tpu.memory_space<vmem>>, %arg3: memref<1x64xf32, #tpu.memory_space<vmem>>, %arg4: memref<64x64xf32, #tpu.memory_space<vmem>>, %arg5: memref<1x64xf32, #tpu.memory_space<vmem>>, %arg6: memref<256x16xf32, #tpu.memory_space<vmem>>, %arg7: memref<16x64xf32, #tpu.memory_space<vmem>>, %arg8: memref<16x64xf32, #tpu.memory_space<vmem>>) attributes {dimension_semantics = [], scalar_prefetch = 0 : i64, scratch_operands = 0 : i64, tpu.core_type = #tpu.core_type<tc>} {
    %c0 = arith.constant 0 : index
    %c0_0 = arith.constant 0 : index
    %0 = vector.load %arg0[%c0, %c0_0] : memref<16x64xf32, #tpu.memory_space<vmem>>, vector<16x64xf32>
    %cst = arith.constant 0.000000e+00 : f32
    %1 = vector.broadcast %cst : f32 to vector<16x64xf32>
    %2 = arith.maximumf %0, %1 : vector<16x64xf32>
    %3 = arith.truncf %2 : vector<16x64xf32> to vector<16x64xbf16>
    %c0_1 = arith.constant 0 : index
    %c0_2 = arith.constant 0 : index
    %4 = vector.load %arg2[%c0_1, %c0_2] : memref<64x64xf32, #tpu.memory_space<vmem>>, vector<64x64xf32>
    %5 = arith.truncf %4 : vector<64x64xf32> to vector<64x64xbf16>
    %cst_3 = arith.constant dense<0.000000e+00> : vector<16x64xf32>
    %6 = tpu.matmul %3, %5, %cst_3 {dimension_numbers = #tpu.dot_dimension_numbers<[1], [0], [0], [1], [0, 0, 1, 1], [], []>} : vector<16x64xbf16>, vector<64x64xbf16>, vector<16x64xf32> -> vector<16x64xf32>
    %c0_4 = arith.constant 0 : index
    %c0_5 = arith.constant 0 : index
    %7 = vector.load %arg3[%c0_4, %c0_5] : memref<1x64xf32, #tpu.memory_space<vmem>>, vector<1x64xf32>
    %8 = vector.broadcast %7 : vector<1x64xf32> to vector<16x64xf32>
    %9 = arith.addf %6, %8 : vector<16x64xf32>
    %cst_6 = arith.constant 0.000000e+00 : f32
    %10 = vector.broadcast %cst_6 : f32 to vector<16x64xf32>
    %11 = arith.maximumf %9, %10 : vector<16x64xf32>
    %12 = arith.truncf %11 : vector<16x64xf32> to vector<16x64xbf16>
    %c0_7 = arith.constant 0 : index
    %c0_8 = arith.constant 0 : index
    %13 = vector.load %arg4[%c0_7, %c0_8] : memref<64x64xf32, #tpu.memory_space<vmem>>, vector<64x64xf32>
    %14 = arith.truncf %13 : vector<64x64xf32> to vector<64x64xbf16>
    %cst_9 = arith.constant dense<0.000000e+00> : vector<16x64xf32>
    %15 = tpu.matmul %12, %14, %cst_9 {dimension_numbers = #tpu.dot_dimension_numbers<[1], [0], [0], [1], [0, 0, 1, 1], [], []>} : vector<16x64xbf16>, vector<64x64xbf16>, vector<16x64xf32> -> vector<16x64xf32>
    %c0_10 = arith.constant 0 : index
    %c0_11 = arith.constant 0 : index
    %16 = vector.load %arg5[%c0_10, %c0_11] : memref<1x64xf32, #tpu.memory_space<vmem>>, vector<1x64xf32>
    %17 = vector.broadcast %16 : vector<1x64xf32> to vector<16x64xf32>
    %18 = arith.addf %15, %17 : vector<16x64xf32>
    %cst_12 = arith.constant 5.000000e-01 : f32
    %19 = vector.broadcast %cst_12 : f32 to vector<16x64xf32>
    %20 = arith.mulf %18, %19 : vector<16x64xf32>
    %c0_13 = arith.constant 0 : index
    %c0_14 = arith.constant 0 : index
    %21 = vector.load %arg7[%c0_13, %c0_14] : memref<16x64xf32, #tpu.memory_space<vmem>>, vector<16x64xf32>
    tpu.vector_store %arg7[%c0_13, %c0_14], %20 {strides = array<i32>} : memref<16x64xf32, #tpu.memory_space<vmem>>, vector<16x64xf32>,
    %c0_15 = arith.constant 0 : index
    %c0_16 = arith.constant 0 : index
    %22 = vector.load %arg1[%c0_15, %c0_16] : memref<16x64xf32, #tpu.memory_space<vmem>>, vector<16x64xf32>
    %23 = arith.truncf %22 : vector<16x64xf32> to vector<16x64xbf16>
    %c0_17 = arith.constant 0 : index
    %c0_18 = arith.constant 0 : index
    %24 = vector.load %arg6[%c0_17, %c0_18] : memref<256x16xf32, #tpu.memory_space<vmem>>, vector<64x16xf32>
    %25 = arith.truncf %24 : vector<64x16xf32> to vector<64x16xbf16>
    %cst_19 = arith.constant dense<0.000000e+00> : vector<16x16xf32>
    %26 = tpu.matmul %23, %25, %cst_19 {dimension_numbers = #tpu.dot_dimension_numbers<[1], [0], [0], [1], [0, 0, 1, 1], [], []>} : vector<16x64xbf16>, vector<64x16xbf16>, vector<16x16xf32> -> vector<16x16xf32>
    %c0_20 = arith.constant 0 : index
    %c0_21 = arith.constant 0 : index
    %27 = vector.load %arg8[%c0_20, %c0_21] : memref<16x64xf32, #tpu.memory_space<vmem>>, vector<16x16xf32>
    tpu.vector_store %arg8[%c0_20, %c0_21], %26 {strides = array<i32>} : memref<16x64xf32, #tpu.memory_space<vmem>>, vector<16x16xf32>,
    %c64 = arith.constant 64 : index
    %c0_22 = arith.constant 0 : index
    %28 = vector.load %arg6[%c64, %c0_22] : memref<256x16xf32, #tpu.memory_space<vmem>>, vector<64x16xf32>
    %29 = arith.truncf %28 : vector<64x16xf32> to vector<64x16xbf16>
    %cst_23 = arith.constant dense<0.000000e+00> : vector<16x16xf32>
    %30 = tpu.matmul %23, %29, %cst_23 {dimension_numbers = #tpu.dot_dimension_numbers<[1], [0], [0], [1], [0, 0, 1, 1], [], []>} : vector<16x64xbf16>, vector<64x16xbf16>, vector<16x16xf32> -> vector<16x16xf32>
    %c0_24 = arith.constant 0 : index
    %c16 = arith.constant 16 : index
    %31 = vector.load %arg8[%c0_24, %c16] : memref<16x64xf32, #tpu.memory_space<vmem>>, vector<16x16xf32>
    tpu.vector_store %arg8[%c0_24, %c16], %30 {strides = array<i32>} : memref<16x64xf32, #tpu.memory_space<vmem>>, vector<16x16xf32>,
    %c128 = arith.constant 128 : index
    %c0_25 = arith.constant 0 : index
    %32 = vector.load %arg6[%c128, %c0_25] : memref<256x16xf32, #tpu.memory_space<vmem>>, vector<64x16xf32>
    %33 = arith.truncf %32 : vector<64x16xf32> to vector<64x16xbf16>
    %cst_26 = arith.constant dense<0.000000e+00> : vector<16x16xf32>
    %34 = tpu.matmul %23, %33, %cst_26 {dimension_numbers = #tpu.dot_dimension_numbers<[1], [0], [0], [1], [0, 0, 1, 1], [], []>} : vector<16x64xbf16>, vector<64x16xbf16>, vector<16x16xf32> -> vector<16x16xf32>
    %c0_27 = arith.constant 0 : index
    %c32 = arith.constant 32 : index
    %35 = vector.load %arg8[%c0_27, %c32] : memref<16x64xf32, #tpu.memory_space<vmem>>, vector<16x16xf32>
    tpu.vector_store %arg8[%c0_27, %c32], %34 {strides = array<i32>} : memref<16x64xf32, #tpu.memory_space<vmem>>, vector<16x16xf32>,
    %c192 = arith.constant 192 : index
    %c0_28 = arith.constant 0 : index
    %36 = vector.load %arg6[%c192, %c0_28] : memref<256x16xf32, #tpu.memory_space<vmem>>, vector<64x16xf32>
    %37 = arith.truncf %36 : vector<64x16xf32> to vector<64x16xbf16>
    %cst_29 = arith.constant dense<0.000000e+00> : vector<16x16xf32>
    %38 = tpu.matmul %23, %37, %cst_29 {dimension_numbers = #tpu.dot_dimension_numbers<[1], [0], [0], [1], [0, 0, 1, 1], [], []>} : vector<16x64xbf16>, vector<64x16xbf16>, vector<16x16xf32> -> vector<16x16xf32>
    %c0_30 = arith.constant 0 : index
    %c48 = arith.constant 48 : index
    %39 = vector.load %arg8[%c0_30, %c48] : memref<16x64xf32, #tpu.memory_space<vmem>>, vector<16x16xf32>
    tpu.vector_store %arg8[%c0_30, %c48], %38 {strides = array<i32>} : memref<16x64xf32, #tpu.memory_space<vmem>>, vector<16x16xf32>,
    return
  }
}

</mosaic_0001>

<llo_original>
// kernel: tpu_custom_call.1
$region0: #{tpu_custom_call.1}
  #allocation0 [shape = 'u32[]', space=smem, size = 0x4, offset = 0x4, fixed_abs, tag = 'smem constant byte address 0x4 - core index']
  #allocation1 [shape = 'u32[144,128]{1,0:T(1,128)}', space=vmem, size = 0x12000, scoped, tag = 'internal scratch']
  %s0 = inlined_call_operand.vmem [shape: f32[16,64], index: 0, kind: input, shape index: {}]
  %s1 = inlined_call_operand.vmem [shape: f32[16,64], index: 1, kind: input, shape index: {}]
  %s2 = inlined_call_operand.vmem [shape: f32[64,64], index: 2, kind: input, shape index: {}]
  %s3 = inlined_call_operand.vmem [shape: f32[1,64], index: 3, kind: input, shape index: {}]
  %s4 = inlined_call_operand.vmem [shape: f32[64,64], index: 4, kind: input, shape index: {}]
  %s5 = inlined_call_operand.vmem [shape: f32[1,64], index: 5, kind: input, shape index: {}]
  %s6 = inlined_call_operand.vmem [shape: f32[256,16], index: 6, kind: input, shape index: {}]
  %s7 = inlined_call_operand.hbm [shape: f32[16,64], index: 7, kind: output, shape index: {0}]
  %s8 = inlined_call_operand.hbm [shape: f32[16,64], index: 8, kind: output, shape index: {1}]
  %9 = xla_tuple %s7, %s8
  %s10 = sld [smem:[#allocation0]]
  $region46: #{tpu_custom_call.1} parent=0
    _
  %s12 = ssub.s32 1, %s10
  %s13 = scalar_select 0, %s12, %s10
  $region1: #{tpu_custom_call.1} parent=0
    #allocation2 [shape = 'u8[8192]{0}', space=vmem, size = 0x2000, scoped, tag = 'output window, operand 0, single buffered']
    #allocation3 [shape = 's32[1]{0}', space=sflag, size = 0x4, scoped, tag = 'scoped memory for tpu_custom_call.1']
    #allocation4 [shape = 'u8[8192]{0}', space=vmem, size = 0x2000, scoped, tag = 'output window, operand 1, single buffered']
    #allocation5 [shape = 's32[1]{0}', space=sflag, size = 0x4, scoped, tag = 'scoped memory for tpu_custom_call.1']
    %14 = vsyncpa [#allocation3], 0
    %15 = vsyncpa [#allocation5], 0
    // Predicated region
    $region2: #{tpu_custom_call.1} parent=1 // pred_check
      _
    $region3: #{tpu_custom_call.1} parent=1 // pred_check_branch
      %17 = sbr.rel (0) target = $region5
    $region4: #{tpu_custom_call.1} parent=1 // pred_region
      _
    $region5: #{tpu_custom_call.1} parent=1 // pred_fallthru
      _
    // Predicated region
    $region6: #{tpu_custom_call.1} parent=1 // pred_check
      _
    $region7: #{tpu_custom_call.1} parent=1 // pred_check_branch
      %19 = sbr.rel (0) target = $region9
    $region8: #{tpu_custom_call.1} parent=1 // pred_region
      _
    $region9: #{tpu_custom_call.1} parent=1 // pred_fallthru
      _
    // Predicated region
    $region10: #{tpu_custom_call.1} parent=1 // pred_check
      _
    $region11: #{tpu_custom_call.1} parent=1 // pred_check_branch
      %21 = sbr.rel (0) target = $region13
    $region12: #{tpu_custom_call.1} parent=1 // pred_region
      _
    $region13: #{tpu_custom_call.1} parent=1 // pred_fallthru
      _
    // Predicated region
    $region14: #{tpu_custom_call.1} parent=1 // pred_check
      _
    $region15: #{tpu_custom_call.1} parent=1 // pred_check_branch
      %23 = sbr.rel (0) target = $region17
    $region16: #{tpu_custom_call.1} parent=1 // pred_region
      _
    $region17: #{tpu_custom_call.1} parent=1 // pred_fallthru
      _
    // Predicated region
    $region18: #{tpu_custom_call.1} parent=1 // pred_check
      _
    $region19: #{tpu_custom_call.1} parent=1 // pred_check_branch
      %25 = sbr.rel (0) target = $region21
    $region20: #{tpu_custom_call.1} parent=1 // pred_region
      _
    $region21: #{tpu_custom_call.1} parent=1 // pred_fallthru
      _
    // Predicated region
    $region22: #{tpu_custom_call.1} parent=1 // pred_check
      _
    $region23: #{tpu_custom_call.1} parent=1 // pred_check_branch
      %27 = sbr.rel (0) target = $region25
    $region24: #{tpu_custom_call.1} parent=1 // pred_region
      _
    $region25: #{tpu_custom_call.1} parent=1 // pred_fallthru
      _
    // Predicated region
    $region26: #{tpu_custom_call.1} parent=1 // pred_check
      _
    $region27: #{tpu_custom_call.1} parent=1 // pred_check_branch
      %29 = sbr.rel (0) target = $region29
    $region28: #{tpu_custom_call.1} parent=1 // pred_region
      _
    $region29: #{tpu_custom_call.1} parent=1 // pred_fallthru
      _
    %v31 = vld [vmem:[%s0] sm:$0xff]
    %v32 = vld [vmem:[%s0 + $0x8] sm:$0xff]
    %v33 = vmax.f32 %v31, 0.0
    %v34 = vmax.f32 %v32, 0.0
    %v35 = vpack.c.bf16 %v34, %v33
    %v36 = vld [vmem:[%s2] sm:$0xff]
    %v37 = vld [vmem:[%s2 + $0x8] sm:$0xff]
    %v38 = vld [vmem:[%s2 + $0x10] sm:$0xff]
    %v39 = vld [vmem:[%s2 + $0x18] sm:$0xff]
    %v40 = vld [vmem:[%s2 + $0x20] sm:$0xff]
    %v41 = vld [vmem:[%s2 + $0x28] sm:$0xff]
    %v42 = vld [vmem:[%s2 + $0x30] sm:$0xff]
    %v43 = vld [vmem:[%s2 + $0x38] sm:$0xff]
    %v44 = vpack.c.bf16 %v37, %v36
    %v45 = vpack.c.bf16 %v39, %v38
    %v46 = vpack.c.bf16 %v41, %v40
    %v47 = vpack.c.bf16 %v43, %v42
    %v48 = vld [vmem:[%s3] sm:$0x1]
    %v50 = vlaneseq
    %v51 = vshrl.u32 %v50, 7
    %v52 = vsub.s32 0, %v51
    %v53 = vrot.slane %v48, %v52
    %vm55 = vcmask 523264
    %v57 = vsel %vm55, %v35, 0
    %59 = vmatprep.subr.bf16.mxu0 0
    %60 = vmatpush1.bf16.msra.mxu0 %v44
    %61 = vmatprep.subr.bf16.mxu0 0
    %62 = vmatpush1.bf16.msra.mxu0 %v45
    %63 = vmatprep.subr.bf16.mxu0 0
    %64 = vmatpush1.bf16.msra.mxu0 %v46
    %65 = vmatprep.subr.bf16.mxu0 0
    %66 = vmatpush1.bf16.msra.mxu0 %v47
    %67 = vmatprep.subr.bf16.mxu0 0
    %68 = vmatpush1.bf16.msra.mxu0 0
    %69 = vmatprep.subr.bf16.mxu0 0
    %70 = vmatpush1.bf16.msra.mxu0 0
    %71 = vmatprep.subr.bf16.mxu0 0
    %72 = vmatpush1.bf16.msra.mxu0 0
    %73 = vmatprep.subr.bf16.mxu0 0
    %74 = vmatpush1.bf16.msra.mxu0 0
    %75 = vmatprep.subr.bf16.mxu0 0
    %76 = vmatpush1.bf16.msra.mxu0 0
    %77 = vmatprep.subr.bf16.mxu0 0
    %78 = vmatpush1.bf16.msra.mxu0 0
    %79 = vmatprep.subr.bf16.mxu0 0
    %80 = vmatpush1.bf16.msra.mxu0 0
    %81 = vmatprep.subr.bf16.mxu0 0
    %82 = vmatpush1.bf16.msra.mxu0 0
    %83 = vmatprep.subr.bf16.mxu0 0
    %84 = vmatpush1.bf16.msra.mxu0 0
    %85 = vmatprep.subr.bf16.mxu0 0
    %86 = vmatpush1.bf16.msra.mxu0 0
    %87 = vmatprep.subr.bf16.mxu0 0
    %88 = vmatpush1.bf16.msra.mxu0 0
    %89 = vmatprep.subr.bf16.mxu0 0
    %90 = vmatpush1.bf16.msra.mxu0 0
    %91 = vmatprep.mubr.bf16.mxu0 0
    %92 = vmatmul.mubr.bf16.gmra.mrb[0].mxu0 %v57
    %v93 = vpop.f32.mrb[0].mxu0
    %v94 = vadd.f32 %v53, %v93
    %v95 = vpop.f32.mrb[0].mxu0
    %v96 = vpop.f32.mrb[0].mxu0
    %v97 = vadd.f32 %v53, %v96
    %v98 = vpop.f32.mrb[0].mxu0
    %99 = vdwg.mxu0
    %v100 = vmax.f32 %v94, 0.0
    %v101 = vmax.f32 %v97, 0.0
    %v102 = vpack.c.bf16 %v101, %v100
    %v103 = vld [vmem:[%s4] sm:$0xff]
    %v104 = vld [vmem:[%s4 + $0x8] sm:$0xff]
    %v105 = vld [vmem:[%s4 + $0x10] sm:$0xff]
    %v106 = vld [vmem:[%s4 + $0x18] sm:$0xff]
    %v107 = vld [vmem:[%s4 + $0x20] sm:$0xff]
    %v108 = vld [vmem:[%s4 + $0x28] sm:$0xff]
    %v109 = vld [vmem:[%s4 + $0x30] sm:$0xff]
    %v110 = vld [vmem:[%s4 + $0x38] sm:$0xff]
    %v111 = vpack.c.bf16 %v104, %v103
    %v112 = vpack.c.bf16 %v106, %v105
    %v113 = vpack.c.bf16 %v108, %v107
    %v114 = vpack.c.bf16 %v110, %v109
    %v115 = vld [vmem:[%s5] sm:$0x1]
    %v117 = vlaneseq
    %v118 = vshrl.u32 %v117, 7
    %v119 = vsub.s32 0, %v118
    %v120 = vrot.slane %v115, %v119
    %v123 = vsel %vm55, %v102, 0
    %125 = vmatprep.subr.bf16.mxu0 0
    %126 = vmatpush1.bf16.msra.mxu0 %v111
    %127 = vmatprep.subr.bf16.mxu0 0
    %128 = vmatpush1.bf16.msra.mxu0 %v112
    %129 = vmatprep.subr.bf16.mxu0 0
    %130 = vmatpush1.bf16.msra.mxu0 %v113
    %131 = vmatprep.subr.bf16.mxu0 0
    %132 = vmatpush1.bf16.msra.mxu0 %v114
    %133 = vmatprep.subr.bf16.mxu0 0
    %134 = vmatpush1.bf16.msra.mxu0 0
    %135 = vmatprep.subr.bf16.mxu0 0
    %136 = vmatpush1.bf16.msra.mxu0 0
    %137 = vmatprep.subr.bf16.mxu0 0
    %138 = vmatpush1.bf16.msra.mxu0 0
    %139 = vmatprep.subr.bf16.mxu0 0
    %140 = vmatpush1.bf16.msra.mxu0 0
    %141 = vmatprep.subr.bf16.mxu0 0
    %142 = vmatpush1.bf16.msra.mxu0 0
    %143 = vmatprep.subr.bf16.mxu0 0
    %144 = vmatpush1.bf16.msra.mxu0 0
    %145 = vmatprep.subr.bf16.mxu0 0
    %146 = vmatpush1.bf16.msra.mxu0 0
    %147 = vmatprep.subr.bf16.mxu0 0
    %148 = vmatpush1.bf16.msra.mxu0 0
    %149 = vmatprep.subr.bf16.mxu0 0
    %150 = vmatpush1.bf16.msra.mxu0 0
    %151 = vmatprep.subr.bf16.mxu0 0
    %152 = vmatpush1.bf16.msra.mxu0 0
    %153 = vmatprep.subr.bf16.mxu0 0
    %154 = vmatpush1.bf16.msra.mxu0 0
    %155 = vmatprep.subr.bf16.mxu0 0
    %156 = vmatpush1.bf16.msra.mxu0 0
    %157 = vmatprep.mubr.bf16.mxu0 0
    %158 = vmatmul.mubr.bf16.gmra.mrb[0].mxu0 %v123
    %v159 = vpop.f32.mrb[0].mxu0
    %v160 = vadd.f32 %v120, %v159
    %v161 = vpop.f32.mrb[0].mxu0
    %v162 = vpop.f32.mrb[0].mxu0
    %v163 = vadd.f32 %v120, %v162
    %v164 = vpop.f32.mrb[0].mxu0
    %165 = vdwg.mxu0
    %v166 = vmul.f32 %v160, 0.5
    %v167 = vmul.f32 %v163, 0.5
    %168 = vst.msk [vmem:[#allocation2] sm:$0xff] %vm55, %v166
    %169 = vst.msk [vmem:[#allocation2 + $0x8] sm:$0xff] %vm55, %v167
    %v170 = vld [vmem:[%s1] sm:$0xff]
    %v171 = vld [vmem:[%s1 + $0x8] sm:$0xff]
    %v172 = vpack.c.bf16 %v171, %v170
    %v173 = vld [vmem:[%s6] sm:$0xff]
    %v174 = vld [vmem:[%s6 + $0x8] sm:$0xff]
    %v175 = vld [vmem:[%s6 + $0x10] sm:$0xff]
    %v176 = vld [vmem:[%s6 + $0x18] sm:$0xff]
    %v177 = vld [vmem:[%s6 + $0x20] sm:$0xff]
    %v178 = vld [vmem:[%s6 + $0x28] sm:$0xff]
    %v179 = vld [vmem:[%s6 + $0x30] sm:$0xff]
    %v180 = vld [vmem:[%s6 + $0x38] sm:$0xff]
    %v181 = vpack.c.bf16 %v174, %v173
    %v182 = vpack.c.bf16 %v176, %v175
    %v183 = vpack.c.bf16 %v178, %v177
    %v184 = vpack.c.bf16 %v180, %v179
    %v186 = vsel %vm55, %v172, 0
    %188 = vmatprep.subr.bf16.mxu0 0
    %189 = vmatpush1.bf16.msra.mxu0 %v181
    %190 = vmatprep.subr.bf16.mxu0 0
    %191 = vmatpush1.bf16.msra.mxu0 %v182
    %192 = vmatprep.subr.bf16.mxu0 0
    %193 = vmatpush1.bf16.msra.mxu0 %v183
    %194 = vmatprep.subr.bf16.mxu0 0
    %195 = vmatpush1.bf16.msra.mxu0 %v184
    %196 = vmatprep.subr.bf16.mxu0 0
    %197 = vmatpush1.bf16.msra.mxu0 0
    %198 = vmatprep.subr.bf16.mxu0 0
    %199 = vmatpush1.bf16.msra.mxu0 0
    %200 = vmatprep.subr.bf16.mxu0 0
    %201 = vmatpush1.bf16.msra.mxu0 0
    %202 = vmatprep.subr.bf16.mxu0 0
    %203 = vmatpush1.bf16.msra.mxu0 0
    %204 = vmatprep.subr.bf16.mxu0 0
    %205 = vmatpush1.bf16.msra.mxu0 0
    %206 = vmatprep.subr.bf16.mxu0 0
    %207 = vmatpush1.bf16.msra.mxu0 0
    %208 = vmatprep.subr.bf16.mxu0 0
    %209 = vmatpush1.bf16.msra.mxu0 0
    %210 = vmatprep.subr.bf16.mxu0 0
    %211 = vmatpush1.bf16.msra.mxu0 0
    %212 = vmatprep.subr.bf16.mxu0 0
    %213 = vmatpush1.bf16.msra.mxu0 0
    %214 = vmatprep.subr.bf16.mxu0 0
    %215 = vmatpush1.bf16.msra.mxu0 0
    %216 = vmatprep.subr.bf16.mxu0 0
    %217 = vmatpush1.bf16.msra.mxu0 0
    %218 = vmatprep.subr.bf16.mxu0 0
    %219 = vmatpush1.bf16.msra.mxu0 0
    %220 = vmatprep.mubr.bf16.mxu0 0
    %221 = vmatmul.mubr.bf16.gmra.mrb[0].mxu0 %v186
    %v222 = vpop.f32.mrb[0].mxu0
    %v223 = vadd.f32 0.0, %v222
    %v224 = vpop.f32.mrb[0].mxu0
    %v225 = vpop.f32.mrb[0].mxu0
    %v226 = vadd.f32 0.0, %v225
    %v227 = vpop.f32.mrb[0].mxu0
    %228 = vdwg.mxu0
    %vm229 = vcmask 130048
    %230 = vst.msk [vmem:[#allocation4] sm:$0xff] %vm229, %v223
    %231 = vst.msk [vmem:[#allocation4 + $0x8] sm:$0xff] %vm229, %v226
    %v232 = vld [vmem:[%s6 + $0x40] sm:$0xff]
    %v233 = vld [vmem:[%s6 + $0x48] sm:$0xff]
    %v234 = vld [vmem:[%s6 + $0x50] sm:$0xff]
    %v235 = vld [vmem:[%s6 + $0x58] sm:$0xff]
    %v236 = vld [vmem:[%s6 + $0x60] sm:$0xff]
    %v237 = vld [vmem:[%s6 + $0x68] sm:$0xff]
    %v238 = vld [vmem:[%s6 + $0x70] sm:$0xff]
    %v239 = vld [vmem:[%s6 + $0x78] sm:$0xff]
    %v240 = vpack.c.bf16 %v233, %v232
    %v241 = vpack.c.bf16 %v235, %v234
    %v242 = vpack.c.bf16 %v237, %v236
    %v243 = vpack.c.bf16 %v239, %v238
    %244 = vmatprep.subr.bf16.mxu0 0
    %245 = vmatpush1.bf16.msra.mxu0 %v240
    %246 = vmatprep.subr.bf16.mxu0 0
    %247 = vmatpush1.bf16.msra.mxu0 %v241
    %248 = vmatprep.subr.bf16.mxu0 0
    %249 = vmatpush1.bf16.msra.mxu0 %v242
    %250 = vmatprep.subr.bf16.mxu0 0
    %251 = vmatpush1.bf16.msra.mxu0 %v243
    %252 = vmatprep.subr.bf16.mxu0 0
    %253 = vmatpush1.bf16.msra.mxu0 0
    %254 = vmatprep.subr.bf16.mxu0 0
    %255 = vmatpush1.bf16.msra.mxu0 0
    %256 = vmatprep.subr.bf16.mxu0 0
    %257 = vmatpush1.bf16.msra.mxu0 0
    %258 = vmatprep.subr.bf16.mxu0 0
    %259 = vmatpush1.bf16.msra.mxu0 0
    %260 = vmatprep.subr.bf16.mxu0 0
    %261 = vmatpush1.bf16.msra.mxu0 0
    %262 = vmatprep.subr.bf16.mxu0 0
    %263 = vmatpush1.bf16.msra.mxu0 0
    %264 = vmatprep.subr.bf16.mxu0 0
    %265 = vmatpush1.bf16.msra.mxu0 0
    %266 = vmatprep.subr.bf16.mxu0 0
    %267 = vmatpush1.bf16.msra.mxu0 0
    %268 = vmatprep.subr.bf16.mxu0 0
    %269 = vmatpush1.bf16.msra.mxu0 0
    %270 = vmatprep.subr.bf16.mxu0 0
    %271 = vmatpush1.bf16.msra.mxu0 0
    %272 = vmatprep.subr.bf16.mxu0 0
    %273 = vmatpush1.bf16.msra.mxu0 0
    %274 = vmatprep.subr.bf16.mxu0 0
    %275 = vmatpush1.bf16.msra.mxu0 0
    %276 = vmatprep.mubr.bf16.mxu0 0
    %277 = vmatmul.mubr.bf16.gmra.mrb[0].mxu0 %v186
    %v278 = vpop.f32.mrb[0].mxu0
    %v279 = vadd.f32 0.0, %v278
    %v280 = vpop.f32.mrb[0].mxu0
    %v281 = vpop.f32.mrb[0].mxu0
    %v282 = vadd.f32 0.0, %v281
    %v283 = vpop.f32.mrb[0].mxu0
    %284 = vdwg.mxu0
    %287 = vrot.lane.b32.xlu0 %v279, 16
    %v288 = vpop.permute.xlu0 %287
    %289 = vrot.lane.b32.xlu0 %v282, 16
    %v290 = vpop.permute.xlu0 %289
    %vm293 = vcmask 261248
    %294 = vst.msk [vmem:[#allocation4] sm:$0xff] %vm293, %v288
    %295 = vst.msk [vmem:[#allocation4 + $0x8] sm:$0xff] %vm293, %v290
    %v296 = vld [vmem:[%s6 + $0x80] sm:$0xff]
    %v297 = vld [vmem:[%s6 + $0x88] sm:$0xff]
    %v298 = vld [vmem:[%s6 + $0x90] sm:$0xff]
    %v299 = vld [vmem:[%s6 + $0x98] sm:$0xff]
    %v300 = vld [vmem:[%s6 + $0xa0] sm:$0xff]
    %v301 = vld [vmem:[%s6 + $0xa8] sm:$0xff]
    %v302 = vld [vmem:[%s6 + $0xb0] sm:$0xff]
    %v303 = vld [vmem:[%s6 + $0xb8] sm:$0xff]
    %v304 = vpack.c.bf16 %v297, %v296
    %v305 = vpack.c.bf16 %v299, %v298
    %v306 = vpack.c.bf16 %v301, %v300
    %v307 = vpack.c.bf16 %v303, %v302
    %308 = vmatprep.subr.bf16.mxu0 0
    %309 = vmatpush1.bf16.msra.mxu0 %v304
    %310 = vmatprep.subr.bf16.mxu0 0
    %311 = vmatpush1.bf16.msra.mxu0 %v305
    %312 = vmatprep.subr.bf16.mxu0 0
    %313 = vmatpush1.bf16.msra.mxu0 %v306
    %314 = vmatprep.subr.bf16.mxu0 0
    %315 = vmatpush1.bf16.msra.mxu0 %v307
    %316 = vmatprep.subr.bf16.mxu0 0
    %317 = vmatpush1.bf16.msra.mxu0 0
    %318 = vmatprep.subr.bf16.mxu0 0
    %319 = vmatpush1.bf16.msra.mxu0 0
    %320 = vmatprep.subr.bf16.mxu0 0
    %321 = vmatpush1.bf16.msra.mxu0 0
    %322 = vmatprep.subr.bf16.mxu0 0
    %323 = vmatpush1.bf16.msra.mxu0 0
    %324 = vmatprep.subr.bf16.mxu0 0
    %325 = vmatpush1.bf16.msra.mxu0 0
    %326 = vmatprep.subr.bf16.mxu0 0
    %327 = vmatpush1.bf16.msra.mxu0 0
    %328 = vmatprep.subr.bf16.mxu0 0
    %329 = vmatpush1.bf16.msra.mxu0 0
    %330 = vmatprep.subr.bf16.mxu0 0
    %331 = vmatpush1.bf16.msra.mxu0 0
    %332 = vmatprep.subr.bf16.mxu0 0
    %333 = vmatpush1.bf16.msra.mxu0 0
    %334 = vmatprep.subr.bf16.mxu0 0
    %335 = vmatpush1.bf16.msra.mxu0 0
    %336 = vmatprep.subr.bf16.mxu0 0
    %337 = vmatpush1.bf16.msra.mxu0 0
    %338 = vmatprep.subr.bf16.mxu0 0
    %339 = vmatpush1.bf16.msra.mxu0 0
    %340 = vmatprep.mubr.bf16.mxu0 0
    %341 = vmatmul.mubr.bf16.gmra.mrb[0].mxu0 %v186
    %v342 = vpop.f32.mrb[0].mxu0
    %v343 = vadd.f32 0.0, %v342
    %v344 = vpop.f32.mrb[0].mxu0
    %v345 = vpop.f32.mrb[0].mxu0
    %v346 = vadd.f32 0.0, %v345
    %v347 = vpop.f32.mrb[0].mxu0
    %348 = vdwg.mxu0
    %351 = vrot.lane.b32.xlu0 %v343, 32
    %v352 = vpop.permute.xlu0 %351
    %353 = vrot.lane.b32.xlu0 %v346, 32
    %v354 = vpop.permute.xlu0 %353
    %vm357 = vcmask 392448
    %358 = vst.msk [vmem:[#allocation4] sm:$0xff] %vm357, %v352
    %359 = vst.msk [vmem:[#allocation4 + $0x8] sm:$0xff] %vm357, %v354
    %v360 = vld [vmem:[%s6 + $0xc0] sm:$0xff]
    %v361 = vld [vmem:[%s6 + $0xc8] sm:$0xff]
    %v362 = vld [vmem:[%s6 + $0xd0] sm:$0xff]
    %v363 = vld [vmem:[%s6 + $0xd8] sm:$0xff]
    %v364 = vld [vmem:[%s6 + $0xe0] sm:$0xff]
    %v365 = vld [vmem:[%s6 + $0xe8] sm:$0xff]
    %v366 = vld [vmem:[%s6 + $0xf0] sm:$0xff]
    %v367 = vld [vmem:[%s6 + $0xf8] sm:$0xff]
    %v368 = vpack.c.bf16 %v361, %v360
    %v369 = vpack.c.bf16 %v363, %v362
    %v370 = vpack.c.bf16 %v365, %v364
    %v371 = vpack.c.bf16 %v367, %v366
    %372 = vmatprep.subr.bf16.mxu0 0
    %373 = vmatpush1.bf16.msra.mxu0 %v368
    %374 = vmatprep.subr.bf16.mxu0 0
    %375 = vmatpush1.bf16.msra.mxu0 %v369
    %376 = vmatprep.subr.bf16.mxu0 0
    %377 = vmatpush1.bf16.msra.mxu0 %v370
    %378 = vmatprep.subr.bf16.mxu0 0
    %379 = vmatpush1.bf16.msra.mxu0 %v371
    %380 = vmatprep.subr.bf16.mxu0 0
    %381 = vmatpush1.bf16.msra.mxu0 0
    %382 = vmatprep.subr.bf16.mxu0 0
    %383 = vmatpush1.bf16.msra.mxu0 0
    %384 = vmatprep.subr.bf16.mxu0 0
    %385 = vmatpush1.bf16.msra.mxu0 0
    %386 = vmatprep.subr.bf16.mxu0 0
    %387 = vmatpush1.bf16.msra.mxu0 0
    %388 = vmatprep.subr.bf16.mxu0 0
    %389 = vmatpush1.bf16.msra.mxu0 0
    %390 = vmatprep.subr.bf16.mxu0 0
    %391 = vmatpush1.bf16.msra.mxu0 0
    %392 = vmatprep.subr.bf16.mxu0 0
    %393 = vmatpush1.bf16.msra.mxu0 0
    %394 = vmatprep.subr.bf16.mxu0 0
    %395 = vmatpush1.bf16.msra.mxu0 0
    %396 = vmatprep.subr.bf16.mxu0 0
    %397 = vmatpush1.bf16.msra.mxu0 0
    %398 = vmatprep.subr.bf16.mxu0 0
    %399 = vmatpush1.bf16.msra.mxu0 0
    %400 = vmatprep.subr.bf16.mxu0 0
    %401 = vmatpush1.bf16.msra.mxu0 0
    %402 = vmatprep.subr.bf16.mxu0 0
    %403 = vmatpush1.bf16.msra.mxu0 0
    %404 = vmatprep.mubr.bf16.mxu0 0
    %405 = vmatmul.mubr.bf16.gmra.mrb[0].mxu0 %v186
    %v406 = vpop.f32.mrb[0].mxu0
    %v407 = vadd.f32 0.0, %v406
    %v408 = vpop.f32.mrb[0].mxu0
    %v409 = vpop.f32.mrb[0].mxu0
    %v410 = vadd.f32 0.0, %v409
    %v411 = vpop.f32.mrb[0].mxu0
    %412 = vdwg.mxu0
    %415 = vrot.lane.b32.xlu0 %v407, 48
    %v416 = vpop.permute.xlu0 %415
    %417 = vrot.lane.b32.xlu0 %v410, 48
    %v418 = vpop.permute.xlu0 %417
    %vm421 = vcmask 523648
    %422 = vst.msk [vmem:[#allocation4] sm:$0xff] %vm421, %v416
    %423 = vst.msk [vmem:[#allocation4 + $0x8] sm:$0xff] %vm421, %v418
    // Predicated region
    $region30: #{tpu_custom_call.1} parent=1 // pred_check
      _
    $region31: #{tpu_custom_call.1} parent=1 // pred_check_branch
      %425 = sbr.rel (0) target = $region33
    $region32: #{tpu_custom_call.1} parent=1 // pred_region
      %s427 = ssub.s32 256, 256
      %428 = vsyncadd [#allocation3], %s427
      %s429 = sshll.u32 [#allocation2], 4
      %s430 = int_to_ptr.vmem [resolvable:$true] %s429
      %435 = dma.vmem_to_hbm [thread:$0]  %s430, 256, %s7, [#allocation3], 128, 128, 8
    $region33: #{tpu_custom_call.1} parent=1 // pred_fallthru
      _
    // Predicated region
    $region34: #{tpu_custom_call.1} parent=1 // pred_check
      _
    $region35: #{tpu_custom_call.1} parent=1 // pred_check_branch
      %437 = sbr.rel (0) target = $region37
    $region36: #{tpu_custom_call.1} parent=1 // pred_region
      %s439 = ssub.s32 256, 256
      %440 = vsyncadd [#allocation5], %s439
      %s441 = sshll.u32 [#allocation4], 4
      %s442 = int_to_ptr.vmem [resolvable:$true] %s441
      %447 = dma.vmem_to_hbm [thread:$0]  %s442, 256, %s8, [#allocation5], 128, 128, 8
    $region37: #{tpu_custom_call.1} parent=1 // pred_fallthru
      _
    // Predicated region
    $region38: #{tpu_custom_call.1} parent=1 // pred_check
      _
    $region39: #{tpu_custom_call.1} parent=1 // pred_check_branch
      %449 = sbr.rel (0) target = $region41
    $region40: #{tpu_custom_call.1} parent=1 // pred_region
      %450 = dma.done [#allocation3], 256
    $region41: #{tpu_custom_call.1} parent=1 // pred_fallthru
      _
    // Predicated region
    $region42: #{tpu_custom_call.1} parent=1 // pred_check
      _
    $region43: #{tpu_custom_call.1} parent=1 // pred_check_branch
      %452 = sbr.rel (0) target = $region45
    $region44: #{tpu_custom_call.1} parent=1 // pred_region
      %453 = dma.done [#allocation5], 256
    $region45: #{tpu_custom_call.1} parent=1 // pred_fallthru
      _
    %454 = vsyncpa [#allocation3], 1
    %455 = vsyncpa [#allocation5], 1

</llo_original>
